<compile_context>
chip_gen: v7x
topology: tpu7x:2x2x1
jax: 0.10.0
libtpu: 0.0.40
codegen_flags: <defaults>
</compile_context>

<pallas_src>
import jax
import jax.numpy as jnp
from jax import lax
from jax.experimental import pallas as pl
from jax.experimental.pallas import tpu as pltpu


def _round_up(v, m):
    return (v + m - 1) // m * m


# ---------------------------------------------------------------------------
# VMEM planning (generation-aware)
# ---------------------------------------------------------------------------
def _vmem_plan():
    """Returns (tile_budget_bytes, vmem_limit_bytes) for the current chip."""
    try:
        cap = int(pltpu.get_tpu_info().vmem_capacity_bytes)
    except Exception:
        cap = 128 << 20  # v5e/v6e physical VMEM; conservative fallback
    # Budget for the live tiles of one pallas_call, leaving headroom for
    # compiler-internal scratch.  ~28 MiB on v6e/v7x (v7x is 64 MiB per TC).
    tile_budget = min(28 << 20, max(8 << 20, cap // 2 - (4 << 20)))
    vmem_limit = int(min(cap * 3 // 4, tile_budget + (16 << 20)))
    return tile_budget, vmem_limit


def _pick_tile_rows(n, d, itemsize, budget):
    """Largest sublane-aligned row tile whose live buffers fit `budget`."""
    if itemsize >= 4:
        row_align = 8
    elif itemsize == 2:
        row_align = 16
    else:
        row_align = 32
    # Resident (1, D) f32 + (D, D) f32 operands, counted double-buffered.
    resident = 2 * (d * d * 4 + d * 4)
    # Double-buffered input tile + double-buffered output tile.
    per_row = 4 * d * itemsize
    tm = 1024  # measured returns flatten past 512-1024 rows for mem-bound ops
    while tm > row_align and resident + per_row * tm > budget:
        tm //= 2
    tm = max(row_align, tm)
    if n < tm:
        tm = _round_up(max(n, 1), row_align)
    return tm
    # TODO(synk): for very large D (where the resident (D,D) alone blows the
    # budget, e.g. on v5e) add 2-D column tiling of zca/sxx instead of
    # shrinking tm toward the 8-row minimum.


# ---------------------------------------------------------------------------
# Kernel A: batch statistics (training branch).
#   grid = (splits, tiles_per_split); leading axis is "parallel" (v7x 2 TCs),
#   trailing axis is the resident-accumulator reduction.
#   in : x tile (TM, D)   (input dtype, fed straight to the MXU)
#   out: sum  (1, D)  f32 per split
#        sxx  (D, D)  f32 per split
# ---------------------------------------------------------------------------
def _make_stats_kernel(n_rows, tm, half, need_mask):
    def kernel(x_ref, sum_ref, sxx_ref):
        @pl.when(pl.program_id(1) == 0)
        def _():
            sum_ref[...] = jnp.zeros_like(sum_ref)
            sxx_ref[...] = jnp.zeros_like(sxx_ref)

        x = x_ref[...]
        if need_mask:
            # Zero rows past the end of the array (ragged last tile and any
            # clamped dummy tile of the 2-way split).
            t = pl.program_id(0) * half + pl.program_id(1)
            row = t * tm + lax.broadcasted_iota(jnp.int32, (tm, 1), 0)
            x = jnp.where(row < n_rows, x, jnp.zeros_like(x))

        # Row sum with f32 accumulation; x^T @ x on the MXU in the input
        # dtype with f32 accumulation.
        sum_ref[...] += jnp.sum(x, axis=0, keepdims=True, dtype=jnp.float32)
        sxx_ref[...] += lax.dot_general(
            x, x,
            dimension_numbers=(((0,), (0,)), ((), ())),
            preferred_element_type=jnp.float32,
        )

    return kernel


def _compute_stats(x, tm, vmem_limit):
    n, d = x.shape
    n_tiles = pl.cdiv(n, tm)
    # Split the reduction across (up to) two TensorCores; on single-TC chips
    # the leading axis just runs sequentially with negligible overhead.
    splits = 2 if n_tiles >= 2 else 1
    half = pl.cdiv(n_tiles, splits)
    need_mask = (n % tm != 0) or (splits * half != n_tiles)

    def x_map(c, i):
        t = c * half + i
        return (jnp.minimum(t, n_tiles - 1), 0)  # clamp dummy tiles (masked)

    sums, sxx = pl.pallas_call(
        _make_stats_kernel(n, tm, half, need_mask),
        out_shape=(
            jax.ShapeDtypeStruct((splits, 1, d), jnp.float32),
            jax.ShapeDtypeStruct((splits, d, d), jnp.float32),
        ),
        grid=(splits, half),
        in_specs=[pl.BlockSpec((tm, d), x_map)],
        out_specs=(
            pl.BlockSpec((None, 1, d), lambda c, i: (c, 0, 0)),
            pl.BlockSpec((None, d, d), lambda c, i: (c, 0, 0)),
        ),
        compiler_params=pltpu.CompilerParams(
            dimension_semantics=("parallel", "arbitrary"),
            vmem_limit_bytes=vmem_limit),
    )(x)
    # Tiny (D, D) merge of per-core partials in plain JAX.
    return jnp.sum(sums, axis=0), jnp.sum(sxx, axis=0)


# ---------------------------------------------------------------------------
# Kernel B: whiten one batch tile:  out = x @ zca - (mean @ zca)
#   in : x tile (TM, D), mz (1, D) f32, zca (D, D)   (mz/zca resident)
#   out: out tile (TM, D)
# ---------------------------------------------------------------------------
def _whiten_kernel(x_ref, mz_ref, zca_ref, out_ref):
    acc = jnp.dot(x_ref[...], zca_ref[...], preferred_element_type=jnp.float32)
    out_ref[...] = (acc - mz_ref[...]).astype(out_ref.dtype)


def _whiten(x, mz, zca, tm, out_dtype, vmem_limit):
    n, d = x.shape
    return pl.pallas_call(
        _whiten_kernel,
        out_shape=jax.ShapeDtypeStruct((n, d), out_dtype),
        grid=(pl.cdiv(n, tm),),
        in_specs=[
            pl.BlockSpec((tm, d), lambda i: (i, 0)),
            pl.BlockSpec((1, d), lambda i: (0, 0)),   # mean @ zca, resident
            pl.BlockSpec((d, d), lambda i: (0, 0)),   # zca, resident
        ],
        out_specs=pl.BlockSpec((tm, d), lambda i: (i, 0)),
        compiler_params=pltpu.CompilerParams(
            dimension_semantics=("parallel",),        # v7x shards row tiles
            vmem_limit_bytes=vmem_limit),
    )(x, mz, zca)


# ---------------------------------------------------------------------------
# Module forward
# ---------------------------------------------------------------------------
def whitening_forward(x, running_mean, running_cov, *, eps=1e-5, training=True):
    """Forward pass of the Whitening module.

    Returns (x_whitened, new_running_mean, new_running_cov) to reproduce the
    PyTorch module's buffer updates functionally.
    """
    orig_dtype = x.dtype
    n, d = x.shape
    tile_budget, vmem_limit = _vmem_plan()
    tm = _pick_tile_rows(n, d, jnp.dtype(x.dtype).itemsize, tile_budget)

    if training:
        s, sxx = _compute_stats(x, tm, vmem_limit)    # (1, D), (D, D) f32
        mean = s / n                                  # (1, D)
        # One-pass covariance: (Sxx - n*mean^T mean) / (n - 1).
        # TODO(synk): switch to a two-pass (mean, then centered x^T x) grid if
        # the data's |mean|/std ratio makes the one-pass form numerically risky.
        cov = (sxx - n * (mean.T @ mean)) / (n - 1)   # n == 1 -> NaN, as in PyTorch
        cov = cov + eps * jnp.eye(d, dtype=jnp.float32)
        new_running_mean = mean[0].astype(running_mean.dtype)
        new_running_cov = cov      # PyTorch stores cov with +eps*I baked in
    else:
        mean = running_mean.astype(jnp.float32)[None, :]
        cov = running_cov.astype(jnp.float32) + eps * jnp.eye(d, dtype=jnp.float32)
        new_running_mean = running_mean
        # PyTorch's in-place `cov += eps*I` mutates running_cov; reproduce that.
        new_running_cov = cov

    # TODO(synk): SVD has no Pallas equivalent; runs in XLA on the tiny (D, D) cov.
    u, svals, _ = jnp.linalg.svd(cov, full_matrices=False)
    u = u.astype(jnp.float32)
    svals = svals.astype(jnp.float32)
    # ZCA build hoisted out of the per-tile kernel (tiny D x D work).
    zca = (u * lax.rsqrt(svals + jnp.float32(eps))[None, :]) @ u.T

    # Precompute mean @ zca so the whiten kernel needs no per-tile centering.
    mz = (mean.astype(jnp.float32) @ zca).astype(jnp.float32)      # (1, D)
    # Feed the MXU in the input dtype (bf16/f16 matmul, f32 accumulation);
    # f32 inputs stay f32 to match the module's cast_inputs=float32 semantics.
    low_prec = jnp.dtype(orig_dtype) in (jnp.dtype(jnp.bfloat16),
                                         jnp.dtype(jnp.float16))
    zca_mm = zca.astype(orig_dtype) if low_prec else zca

    out = _whiten(x, mz, zca_mm, tm, orig_dtype, vmem_limit)
    return out, new_running_mean, new_running_cov


# ---------------------------------------------------------------------------
# Pure-JAX reference (mirrors the PyTorch training-mode forward)
# ---------------------------------------------------------------------------
def _reference(x, eps=1e-5):
    x = x.astype(jnp.float32)
    n, d = x.shape
    mean = x.mean(axis=0)
    xc = x - mean
    cov = xc.T @ xc / (n - 1) + eps * jnp.eye(d, dtype=jnp.float32)
    u, s, _ = jnp.linalg.svd(cov, full_matrices=False)
    zca = u @ jnp.diag(1.0 / jnp.sqrt(s + eps)) @ u.T
    return xc @ zca


if __name__ == "__main__":
    key = jax.random.PRNGKey(0)

    # --- primary small test, consistent with the module (batch=8, dim=32) ---
    N, D = 8, 32
    x = jax.random.normal(key, (N, D), dtype=jnp.float32)
    running_mean = jnp.zeros((D,), dtype=jnp.float32)
    running_cov = jnp.eye(D, dtype=jnp.float32)

    out, new_mean, new_cov = whitening_forward(
        x, running_mean, running_cov, eps=1e-5, training=True)
    out = jax.block_until_ready(out)

    ref = _reference(x)
    assert out.shape == (N, D) and out.dtype == x.dtype
    assert jnp.max(jnp.abs(out - ref)) < 1e-3, "mismatch vs reference"
    assert jnp.max(jnp.abs(new_mean - x.mean(axis=0))) < 1e-4
    assert new_cov.shape == (D, D)

    # --- robustness check: ragged row tiles + 2-way split reduction path ---
    k2 = jax.random.PRNGKey(0)
    N2, D2 = 2500, 96                       # not multiples of the tile sizes
    x2 = jax.random.normal(k2, (N2, D2), dtype=jnp.float32)
    out2, _, _ = whitening_forward(
        x2, jnp.zeros((D2,), jnp.float32), jnp.eye(D2, dtype=jnp.float32),
        eps=1e-5, training=True)
    out2 = jax.block_until_ready(out2)
    ref2 = _reference(x2)
    assert out2.shape == (N2, D2)
    assert jnp.max(jnp.abs(out2 - ref2)) < 2e-3, "mismatch vs reference (ragged)"

    print("KERNEL_OK")
</pallas_src>

<mosaic_0001>
module attributes {stable_mosaic.version = 11 : i64} {
  func.func @kernel(%arg0: i32, %arg1: i32, %arg2: memref<8x32xf32, #tpu.memory_space<vmem>>, %arg3: memref<1x1x32xf32, #tpu.memory_space<vmem>>, %arg4: memref<1x32x32xf32, #tpu.memory_space<vmem>>) attributes {dimension_semantics = [#tpu.dimension_semantics<parallel>, #tpu.dimension_semantics<arbitrary>], iteration_bounds = array<i64: 1, 1>, scalar_prefetch = 0 : i64, scratch_operands = 0 : i64, tpu.core_type = #tpu.core_type<tc>, window_params = [{transform_indices = @transform_0, window_bounds = array<i64: 8, 32>}, {transform_indices = @transform_1, window_bounds = array<i64: 1, 1, 32>}, {transform_indices = @transform_2, window_bounds = array<i64: 1, 32, 32>}]} {
    %c0_i32 = arith.constant 0 : i32
    %0 = arith.cmpi eq, %arg1, %c0_i32 : i32
    %1 = arith.extui %0 : i1 to i32
    %c0_i32_0 = arith.constant 0 : i32
    %2 = arith.cmpi ne, %1, %c0_i32_0 : i32
    scf.if %2 {
      %cst_15 = arith.constant 0.000000e+00 : f32
      %19 = vector.broadcast %cst_15 : f32 to vector<1x32xf32>
      %c0_16 = arith.constant 0 : index
      %c0_17 = arith.constant 0 : index
      %c0_18 = arith.constant 0 : index
      %20 = vector.load %arg3[%c0_16, %c0_17, %c0_18] : memref<1x1x32xf32, #tpu.memory_space<vmem>>, vector<1x1x32xf32>
      %21 = vector.shape_cast %20 : vector<1x1x32xf32> to vector<1x32xf32>
      %22 = vector.shape_cast %19 : vector<1x32xf32> to vector<1x1x32xf32>
      tpu.vector_store %arg3[%c0_16, %c0_17, %c0_18], %22 {strides = array<i32>} : memref<1x1x32xf32, #tpu.memory_space<vmem>>, vector<1x1x32xf32>,
      %cst_19 = arith.constant 0.000000e+00 : f32
      %23 = vector.broadcast %cst_19 : f32 to vector<32x32xf32>
      %c0_20 = arith.constant 0 : index
      %c0_21 = arith.constant 0 : index
      %c0_22 = arith.constant 0 : index
      %24 = vector.load %arg4[%c0_20, %c0_21, %c0_22] : memref<1x32x32xf32, #tpu.memory_space<vmem>>, vector<1x32x32xf32>
      %25 = vector.shape_cast %24 : vector<1x32x32xf32> to vector<32x32xf32>
      %26 = vector.shape_cast %23 : vector<32x32xf32> to vector<1x32x32xf32>
      tpu.vector_store %arg4[%c0_20, %c0_21, %c0_22], %26 {strides = array<i32>} : memref<1x32x32xf32, #tpu.memory_space<vmem>>, vector<1x32x32xf32>,
    } else {
    }
    %c0 = arith.constant 0 : index
    %c0_1 = arith.constant 0 : index
    %3 = vector.load %arg2[%c0, %c0_1] : memref<8x32xf32, #tpu.memory_space<vmem>>, vector<8x32xf32>
    %c0_2 = arith.constant 0 : index
    %c0_3 = arith.constant 0 : index
    %c0_4 = arith.constant 0 : index
    %4 = vector.load %arg3[%c0_2, %c0_3, %c0_4] : memref<1x1x32xf32, #tpu.memory_space<vmem>>, vector<1x1x32xf32>
    %5 = vector.shape_cast %4 : vector<1x1x32xf32> to vector<1x32xf32>
    %cst = arith.constant dense<0.000000e+00> : vector<32xf32>
    %6 = vector.multi_reduction <add>, %3, %cst [0] : vector<8x32xf32> to vector<32xf32>
    %7 = vector.shape_cast %6 : vector<32xf32> to vector<1x32xf32>
    %8 = arith.addf %5, %7 : vector<1x32xf32>
    %c0_5 = arith.constant 0 : index
    %c0_6 = arith.constant 0 : index
    %c0_7 = arith.constant 0 : index
    %9 = vector.load %arg3[%c0_5, %c0_6, %c0_7] : memref<1x1x32xf32, #tpu.memory_space<vmem>>, vector<1x1x32xf32>
    %10 = vector.shape_cast %9 : vector<1x1x32xf32> to vector<1x32xf32>
    %11 = vector.shape_cast %8 : vector<1x32xf32> to vector<1x1x32xf32>
    tpu.vector_store %arg3[%c0_5, %c0_6, %c0_7], %11 {strides = array<i32>} : memref<1x1x32xf32, #tpu.memory_space<vmem>>, vector<1x1x32xf32>,
    %c0_8 = arith.constant 0 : index
    %c0_9 = arith.constant 0 : index
    %c0_10 = arith.constant 0 : index
    %12 = vector.load %arg4[%c0_8, %c0_9, %c0_10] : memref<1x32x32xf32, #tpu.memory_space<vmem>>, vector<1x32x32xf32>
    %13 = vector.shape_cast %12 : vector<1x32x32xf32> to vector<32x32xf32>
    %cst_11 = arith.constant dense<0.000000e+00> : vector<32x32xf32>
    %14 = tpu.matmul %3, %3, %cst_11 {dimension_numbers = #tpu.dot_dimension_numbers<[0], [0], [1], [1], [0, 1, 1, 1], [], []>} : vector<8x32xf32>, vector<8x32xf32>, vector<32x32xf32> -> vector<32x32xf32>
    %15 = arith.addf %13, %14 : vector<32x32xf32>
    %c0_12 = arith.constant 0 : index
    %c0_13 = arith.constant 0 : index
    %c0_14 = arith.constant 0 : index
    %16 = vector.load %arg4[%c0_12, %c0_13, %c0_14] : memref<1x32x32xf32, #tpu.memory_space<vmem>>, vector<1x32x32xf32>
    %17 = vector.shape_cast %16 : vector<1x32x32xf32> to vector<32x32xf32>
    %18 = vector.shape_cast %15 : vector<32x32xf32> to vector<1x32x32xf32>
    tpu.vector_store %arg4[%c0_12, %c0_13, %c0_14], %18 {strides = array<i32>} : memref<1x32x32xf32, #tpu.memory_space<vmem>>, vector<1x32x32xf32>,
    return
  }
  func.func @transform_0(%arg0: i32, %arg1: i32) -> (i32, i32) {
    %c1_i32 = arith.constant 1 : i32
    %0 = arith.muli %arg0, %c1_i32 : i32
    %1 = arith.addi %0, %arg1 : i32
    %c0_i32 = arith.constant 0 : i32
    %2 = arith.minsi %1, %c0_i32 : i32
    %c0_i32_0 = arith.constant 0 : i32
    %c0_i32_1 = arith.constant 0 : i32
    return %2, %c0_i32_0 : i32, i32
  }
  func.func @transform_1(%arg0: i32, %arg1: i32) -> (i32, i32, i32) {
    %c0_i32 = arith.constant 0 : i32
    %c0_i32_0 = arith.constant 0 : i32
    %c0_i32_1 = arith.constant 0 : i32
    return %arg0, %c0_i32, %c0_i32_0 : i32, i32, i32
  }
  func.func @transform_2(%arg0: i32, %arg1: i32) -> (i32, i32, i32) {
    %c0_i32 = arith.constant 0 : i32
    %c0_i32_0 = arith.constant 0 : i32
    %c0_i32_1 = arith.constant 0 : i32
    return %arg0, %c0_i32, %c0_i32_0 : i32, i32, i32
  }
}

</mosaic_0001>

<llo_original>
// kernel: tpu_custom_call.1
$region0: #{tpu_custom_call.1}
  #allocation0 [shape = 'u32[]', space=smem, size = 0x4, offset = 0x4, fixed_abs, tag = 'smem constant byte address 0x4 - core index']
  #allocation1 [shape = 'u32[144,128]{1,0:T(1,128)}', space=vmem, size = 0x12000, scoped, tag = 'internal scratch']
  %s0 = inlined_call_operand.hbm [shape: f32[8,32], index: 0, kind: input, shape index: {}]
  %s1 = inlined_call_operand.hbm [shape: f32[1,1,32], index: 1, kind: output, shape index: {0}]
  %s2 = inlined_call_operand.hbm [shape: f32[1,32,32], index: 2, kind: output, shape index: {1}]
  %3 = xla_tuple %s1, %s2
  %s4 = sld [smem:[#allocation0]]
  $region30: #{tpu_custom_call.1} parent=0
    _
  %s6 = ssub.s32 1, %s4
  %s7 = scalar_select 0, %s6, %s4
  $region1: #{tpu_custom_call.1} parent=0
    #allocation2 [shape = 'u8[4096]{0}', space=vmem, size = 0x1000, scoped, tag = 'input window, operand 0, single buffered']
    #allocation3 [shape = 's32[1]{0}', space=sflag, size = 0x4, scoped, tag = 'scoped memory for tpu_custom_call.1']
    #allocation4 [shape = 's32[1]{0}', space=sflag, size = 0x4, scoped, tag = 'scoped memory for tpu_custom_call.1']
    #allocation5 [shape = 'u8[512]{0}', space=vmem, size = 0x400, scoped, tag = 'output window, operand 0, single buffered']
    #allocation6 [shape = 'u8[16384]{0}', space=vmem, size = 0x4000, scoped, tag = 'output window, operand 1, single buffered']
    #allocation7 [shape = 's32[1]{0}', space=sflag, size = 0x4, scoped, tag = 'scoped memory for tpu_custom_call.1']
    %8 = vsyncpa [#allocation3], 0
    %9 = vsyncpa [#allocation4], 0
    %10 = vsyncpa [#allocation7], 0
    // Predicated region
    $region2: #{tpu_custom_call.1} parent=1 // pred_check
      _
    $region3: #{tpu_custom_call.1} parent=1 // pred_check_branch
      %12 = sbr.rel (0) target = $region5
    $region4: #{tpu_custom_call.1} parent=1 // pred_region
      %s13 = sadd.s32 0, 0
      %p14 = scmp.lt.s32.totalorder %s13, 0
      %s15 = scalar_select %p14, %s13, 0
      %s17 = ssub.s32 128, 128
      %18 = vsyncadd [#allocation3], %s17
      %s19 = smul.addr %s15, 128
      %s20 = scalar_lea.hbm %s0, %s19
      %s22 = sshll.u32 [#allocation2], 4
      %s23 = int_to_ptr.vmem [resolvable:$true] %s22
      %25 = dma.hbm_to_vmem [thread:$0]  %s20, 128, %s23, [#allocation3]
    $region5: #{tpu_custom_call.1} parent=1 // pred_fallthru
      _
    // Predicated region
    $region6: #{tpu_custom_call.1} parent=1 // pred_check
      _
    $region7: #{tpu_custom_call.1} parent=1 // pred_check_branch
      %27 = sbr.rel (0) target = $region9
    $region8: #{tpu_custom_call.1} parent=1 // pred_region
      %28 = dma.done [#allocation3], 128
    $region9: #{tpu_custom_call.1} parent=1 // pred_fallthru
      _
    %s29 = sadd.s32 0, 0
    %p30 = scmp.lt.s32.totalorder %s29, 0
    %s31 = scalar_select %p30, %s29, 0
    %p32 = scmp.eq.s32.totalorder 0, 0
    // Predicated region
    $region10: #{tpu_custom_call.1} parent=1 // pred_check
      %p33 = pneg %p32
    $region11: #{tpu_custom_call.1} parent=1 // pred_check_branch
      %35 = sbr.rel (%p33) target = $region13
    $region12: #{tpu_custom_call.1} parent=1 // pred_region
      %vm36 = vcmask 253952
      %37 = vst.msk [vmem:[#allocation5] sm:$0x1] %vm36, 0.0
      %vm38 = vcmask 261120
      %39 = vst.msk [vmem:[#allocation6] sm:$0xff] %vm38, 0.0
      %40 = vst.msk [vmem:[#allocation6 + $0x8] sm:$0xff] %vm38, 0.0
      %41 = vst.msk [vmem:[#allocation6 + $0x10] sm:$0xff] %vm38, 0.0
      %42 = vst.msk [vmem:[#allocation6 + $0x18] sm:$0xff] %vm38, 0.0
    $region13: #{tpu_custom_call.1} parent=1 // pred_fallthru
      _
    %v43 = vld [vmem:[#allocation2] sm:$0xff]
    %v44 = vld [vmem:[#allocation5] sm:$0x1]
    %vm45 = vcmask 261120
    %v46 = vsel %vm45, %v43, 0.0
    %v47 = vrot.slane %v46, 4
    %v48 = vadd.f32 %v46, %v47
    %v49 = vrot.slane %v48, 2
    %v50 = vadd.f32 %v48, %v49
    %v51 = vrot.slane %v50, 1
    %v52 = vadd.f32 %v50, %v51
    %v53 = vadd.f32 %v44, %v52
    %vm54 = vcmask 253952
    %55 = vst.msk [vmem:[#allocation5] sm:$0x1] %vm54, %v53
    %v56 = vld [vmem:[#allocation6] sm:$0xff]
    %v57 = vld [vmem:[#allocation6 + $0x8] sm:$0xff]
    %v58 = vld [vmem:[#allocation6 + $0x10] sm:$0xff]
    %v59 = vld [vmem:[#allocation6 + $0x18] sm:$0xff]
    %60 = vxpose.xlu0.b32.start [1/16] %v43, 128
    %61 = vxpose.xlu0.b32.cont [2/16] 0.0, 128
    %62 = vxpose.xlu0.b32.cont [3/16] 0.0, 128
    %63 = vxpose.xlu0.b32.cont [4/16] 0.0, 128
    %64 = vxpose.xlu0.b32.cont [5/16] 0.0, 128
    %65 = vxpose.xlu0.b32.cont [6/16] 0.0, 128
    %66 = vxpose.xlu0.b32.cont [7/16] 0.0, 128
    %67 = vxpose.xlu0.b32.cont [8/16] 0.0, 128
    %68 = vxpose.xlu0.b32.cont [9/16] 0.0, 128
    %69 = vxpose.xlu0.b32.cont [10/16] 0.0, 128
    %70 = vxpose.xlu0.b32.cont [11/16] 0.0, 128
    %71 = vxpose.xlu0.b32.cont [12/16] 0.0, 128
    %72 = vxpose.xlu0.b32.cont [13/16] 0.0, 128
    %73 = vxpose.xlu0.b32.cont [14/16] 0.0, 128
    %74 = vxpose.xlu0.b32.cont [15/16] 0.0, 128
    %75 = vxpose.xlu0.b32.end [16/16] 0.0, 128
    %v76 = vpop.trf.xlu0
    %v77 = vpop.trf.xlu0
    %v78 = vpop.trf.xlu0
    %v79 = vpop.trf.xlu0
    %v80 = vpop.trf.xlu0
    %v81 = vpop.trf.xlu0
    %v82 = vpop.trf.xlu0
    %v83 = vpop.trf.xlu0
    %v84 = vpop.trf.xlu0
    %v85 = vpop.trf.xlu0
    %v86 = vpop.trf.xlu0
    %v87 = vpop.trf.xlu0
    %v88 = vpop.trf.xlu0
    %v89 = vpop.trf.xlu0
    %v90 = vpop.trf.xlu0
    %v91 = vpop.trf.xlu0
    %vm92 = vcmask 64512
    %v94 = vsel %vm92, %v76, 0
    %v97 = vsel %vm92, %v77, 0
    %v100 = vsel %vm92, %v78, 0
    %v103 = vsel %vm92, %v79, 0
    %105 = vmatprep.subr.mxu0 0.0
    %106 = vmatpush1.msra.mxu0 %v43
    %107 = vmatprep.subr.mxu0 0.0
    %108 = vmatpush1.msra.mxu0 0.0
    %109 = vmatprep.subr.mxu0 0.0
    %110 = vmatpush1.msra.mxu0 0.0
    %111 = vmatprep.subr.mxu0 0.0
    %112 = vmatpush1.msra.mxu0 0.0
    %113 = vmatprep.subr.mxu0 0.0
    %114 = vmatpush1.msra.mxu0 0.0
    %115 = vmatprep.subr.mxu0 0.0
    %116 = vmatpush1.msra.mxu0 0.0
    %117 = vmatprep.subr.mxu0 0.0
    %118 = vmatpush1.msra.mxu0 0.0
    %119 = vmatprep.subr.mxu0 0.0
    %120 = vmatpush1.msra.mxu0 0.0
    %121 = vmatprep.subr.mxu0 0.0
    %122 = vmatpush1.msra.mxu0 0.0
    %123 = vmatprep.subr.mxu0 0.0
    %124 = vmatpush1.msra.mxu0 0.0
    %125 = vmatprep.subr.mxu0 0.0
    %126 = vmatpush1.msra.mxu0 0.0
    %127 = vmatprep.subr.mxu0 0.0
    %128 = vmatpush1.msra.mxu0 0.0
    %129 = vmatprep.subr.mxu0 0.0
    %130 = vmatpush1.msra.mxu0 0.0
    %131 = vmatprep.subr.mxu0 0.0
    %132 = vmatpush1.msra.mxu0 0.0
    %133 = vmatprep.subr.mxu0 0.0
    %134 = vmatpush1.msra.mxu0 0.0
    %135 = vmatprep.subr.mxu0 0.0
    %136 = vmatpush1.msra.mxu0 0.0
    %137 = vmatprep.subr.mxu0 0.0
    %138 = vmatpush1.msra.mxu0 0.0
    %139 = vmatprep.subr.mxu0 0.0
    %140 = vmatpush1.msra.mxu0 0.0
    %141 = vmatprep.subr.mxu0 0.0
    %142 = vmatpush1.msra.mxu0 0.0
    %143 = vmatprep.subr.mxu0 0.0
    %144 = vmatpush1.msra.mxu0 0.0
    %145 = vmatprep.subr.mxu0 0.0
    %146 = vmatpush1.msra.mxu0 0.0
    %147 = vmatprep.subr.mxu0 0.0
    %148 = vmatpush1.msra.mxu0 0.0
    %149 = vmatprep.subr.mxu0 0.0
    %150 = vmatpush1.msra.mxu0 0.0
    %151 = vmatprep.subr.mxu0 0.0
    %152 = vmatpush1.msra.mxu0 0.0
    %153 = vmatprep.subr.mxu0 0.0
    %154 = vmatpush1.msra.mxu0 0.0
    %155 = vmatprep.subr.mxu0 0.0
    %156 = vmatpush1.msra.mxu0 0.0
    %157 = vmatprep.subr.mxu0 0.0
    %158 = vmatpush1.msra.mxu0 0.0
    %159 = vmatprep.subr.mxu0 0.0
    %160 = vmatpush1.msra.mxu0 0.0
    %161 = vmatprep.subr.mxu0 0.0
    %162 = vmatpush1.msra.mxu0 0.0
    %163 = vmatprep.subr.mxu0 0.0
    %164 = vmatpush1.msra.mxu0 0.0
    %165 = vmatprep.subr.mxu0 0.0
    %166 = vmatpush1.msra.mxu0 0.0
    %167 = vmatprep.subr.mxu0 0.0
    %168 = vmatpush1.msra.mxu0 0.0
    %169 = vmatprep.mubr.f32.mxu0 0.0
    %170 = vmatmul.mubr.f32.gmra.mrb[0].mxu0 %v94
    %v171 = vpop.f32.mrb[0].mxu0
    %v172 = vadd.f32 0.0, %v171
    %v173 = vpop.f32.mrb[0].mxu0
    %174 = vmatprep.mubr.f32.mxu0 0.0
    %175 = vmatmul.mubr.f32.gmra.mrb[0].mxu0 %v97
    %v176 = vpop.f32.mrb[0].mxu0
    %v177 = vadd.f32 0.0, %v176
    %v178 = vpop.f32.mrb[0].mxu0
    %179 = vmatprep.mubr.f32.mxu0 0.0
    %180 = vmatmul.mubr.f32.gmra.mrb[0].mxu0 %v100
    %v181 = vpop.f32.mrb[0].mxu0
    %v182 = vadd.f32 0.0, %v181
    %v183 = vpop.f32.mrb[0].mxu0
    %184 = vmatprep.mubr.f32.mxu0 0.0
    %185 = vmatmul.mubr.f32.gmra.mrb[0].mxu0 %v103
    %v186 = vpop.f32.mrb[0].mxu0
    %v187 = vadd.f32 0.0, %v186
    %v188 = vpop.f32.mrb[0].mxu0
    %189 = vdwg.mxu0
    %v190 = vadd.f32 %v56, %v172
    %v191 = vadd.f32 %v57, %v177
    %v192 = vadd.f32 %v58, %v182
    %v193 = vadd.f32 %v59, %v187
    %194 = vst.msk [vmem:[#allocation6] sm:$0xff] %vm45, %v190
    %195 = vst.msk [vmem:[#allocation6 + $0x8] sm:$0xff] %vm45, %v191
    %196 = vst.msk [vmem:[#allocation6 + $0x10] sm:$0xff] %vm45, %v192
    %197 = vst.msk [vmem:[#allocation6 + $0x18] sm:$0xff] %vm45, %v193
    // Predicated region
    $region14: #{tpu_custom_call.1} parent=1 // pred_check
      _
    $region15: #{tpu_custom_call.1} parent=1 // pred_check_branch
      %199 = sbr.rel (0) target = $region17
    $region16: #{tpu_custom_call.1} parent=1 // pred_region
      %s201 = ssub.s32 16, 16
      %202 = vsyncadd [#allocation4], %s201
      %s204 = sshll.u32 [#allocation5], 4
      %s205 = int_to_ptr.vmem [resolvable:$true] %s204
      %207 = dma.vmem_to_hbm [thread:$0]  %s205, 16, %s1, [#allocation4]
    $region17: #{tpu_custom_call.1} parent=1 // pred_fallthru
      _
    // Predicated region
    $region18: #{tpu_custom_call.1} parent=1 // pred_check
      _
    $region19: #{tpu_custom_call.1} parent=1 // pred_check_branch
      %209 = sbr.rel (0) target = $region21
    $region20: #{tpu_custom_call.1} parent=1 // pred_region
      %s211 = ssub.s32 512, 512
      %212 = vsyncadd [#allocation7], %s211
      %s213 = sshll.u32 [#allocation6], 4
      %s214 = int_to_ptr.vmem [resolvable:$true] %s213
      %219 = dma.vmem_to_hbm [thread:$0]  %s214, 512, %s2, [#allocation7], 128, 128, 8
    $region21: #{tpu_custom_call.1} parent=1 // pred_fallthru
      _
    // Predicated region
    $region22: #{tpu_custom_call.1} parent=1 // pred_check
      _
    $region23: #{tpu_custom_call.1} parent=1 // pred_check_branch
      %221 = sbr.rel (0) target = $region25
    $region24: #{tpu_custom_call.1} parent=1 // pred_region
      %222 = dma.done [#allocation4], 16
    $region25: #{tpu_custom_call.1} parent=1 // pred_fallthru
      _
    // Predicated region
    $region26: #{tpu_custom_call.1} parent=1 // pred_check
      _
    $region27: #{tpu_custom_call.1} parent=1 // pred_check_branch
      %224 = sbr.rel (0) target = $region29
    $region28: #{tpu_custom_call.1} parent=1 // pred_region
      %225 = dma.done [#allocation7], 512
    $region29: #{tpu_custom_call.1} parent=1 // pred_fallthru
      _
    %226 = vsyncpa [#allocation3], 1
    %227 = vsyncpa [#allocation4], 1
    %228 = vsyncpa [#allocation7], 1

</llo_original>
